<compile_context>
chip_gen: v7x
topology: tpu7x:2x2x1
jax: 0.10.0
libtpu: 0.0.40
codegen_flags: <defaults>
</compile_context>

<pallas_src>
import functools

import jax
import jax.numpy as jnp
from jax.experimental import pallas as pl
from jax.experimental.pallas import tpu as pltpu


def _round_up(n: int, m: int) -> int:
    return ((n + m - 1) // m) * m


def _vmem_capacity_bytes() -> int:
    try:
        return int(pltpu.get_tpu_info().vmem_capacity_bytes)
    except Exception:
        return 64 << 20  # conservative default: v7x per-TensorCore VMEM


# --------------------------- fused single-pass kernel -----------------------

def _rmsnorm_fused_kernel(x_ref, wb_ref, o_ref, *, inv_s: float, eps: float):
    # x_ref/o_ref: (r_tile, S); wb_ref: (r_tile, 2) = [scale, bias] per row.
    xf = x_ref[...].astype(jnp.float32)
    ss = jnp.sum(xf * xf, axis=-1, keepdims=True)              # (r_tile, 1)
    inv = jax.lax.rsqrt(ss * inv_s + eps)                      # EUP slot
    w = wb_ref[:, 0:1].astype(jnp.float32)
    b = wb_ref[:, 1:2].astype(jnp.float32)
    s = inv * w                                                # fold scale on (r_tile, 1)
    # Re-read x for the normalize pass (keeps f32 vreg pressure low for bf16 in).
    o_ref[...] = (x_ref[...].astype(jnp.float32) * s + b).astype(o_ref.dtype)


# ----------------------- two-pass large-S fallback kernels ------------------

def _ss_kernel(x_ref, ss_ref, *, s_true: int, s_chunk: int):
    # Accumulate per-row sum of squares over spatial chunks; mask OOB tail lanes.
    s_idx = pl.program_id(1)

    @pl.when(s_idx == 0)
    def _():
        ss_ref[...] = jnp.zeros_like(ss_ref)

    xf = x_ref[...].astype(jnp.float32)
    col = s_idx * s_chunk + jax.lax.broadcasted_iota(jnp.int32, xf.shape, 1)
    xm = jnp.where(col < s_true, xf, 0.0)
    ss_ref[...] += jnp.sum(xm * xm, axis=-1, keepdims=True)


def _apply_kernel(x_ref, sb_ref, o_ref):
    # sb_ref: (r_tile, 2) f32 = [inv_norm * scale, bias] per row.
    s = sb_ref[:, 0:1]
    b = sb_ref[:, 1:2]
    o_ref[...] = (x_ref[...].astype(jnp.float32) * s + b).astype(o_ref.dtype)


# --------------------------------- wrapper -----------------------------------

def spatial_rmsnorm(x: jax.Array, scale: jax.Array, bias: jax.Array,
                    eps: float = 1e-5, *, ws_cap_bytes: int | None = None) -> jax.Array:
    """x: (B, C, H, W); scale/bias: (C,). Returns (B, C, H, W) in x.dtype."""
    B, C, H, W = x.shape
    S = H * W
    R = B * C
    x2 = x.reshape(R, S)                       # metadata-only reshape, no copy

    cap = _vmem_capacity_bytes()
    if ws_cap_bytes is None:
        # double-buffered in/out blocks + param blocks must fit comfortably.
        ws_cap_bytes = min(40 << 20, int(cap * 0.6))
    vmem_limit = int(min(max(ws_cap_bytes + (16 << 20), 32 << 20), int(cap * 0.75)))

    # Per-row scale/bias (per-channel params broadcast over batch), folded into
    # one (R, 2) array so only a single lane-padded param block is DMA'd.
    w_rows = jnp.broadcast_to(scale[None, :], (B, C)).reshape(R)
    b_rows = jnp.broadcast_to(bias[None, :], (B, C)).reshape(R)

    x_isz = x.dtype.itemsize
    p_isz = scale.dtype.itemsize
    # Working-set bytes per tile row: x + out blocks (double buffered) plus the
    # lane-padded (r_tile, 2) param block (2 buffers).
    per_row = 4 * S * x_isz + 2 * 128 * p_isz

    if 8 * per_row <= ws_cap_bytes:
        # -------------------- fused single-pass path --------------------
        wb = jnp.stack([w_rows, b_rows], axis=-1)              # (R, 2)
        max_rows = max(8, (ws_cap_bytes // per_row) // 8 * 8)
        # Keep >= ~4 grid steps when R allows (pipelining + megacore sharding).
        r_tile = min(max_rows, max(8, _round_up(pl.cdiv(R, 4), 8)))
        r_tile = min(r_tile, _round_up(R, 8))
        grid = (pl.cdiv(R, r_tile),)

        out = pl.pallas_call(
            functools.partial(_rmsnorm_fused_kernel,
                              inv_s=1.0 / float(S), eps=float(eps)),
            out_shape=jax.ShapeDtypeStruct((R, S), x.dtype),
            grid_spec=pltpu.PrefetchScalarGridSpec(
                num_scalar_prefetch=0,
                grid=grid,
                in_specs=[
                    pl.BlockSpec((r_tile, S), lambda i: (i, 0)),   # x rows (full S)
                    pl.BlockSpec((r_tile, 2), lambda i: (i, 0)),   # [scale, bias]
                ],
                out_specs=pl.BlockSpec((r_tile, S), lambda i: (i, 0)),
            ),
            compiler_params=pltpu.CompilerParams(
                dimension_semantics=("parallel",),
                vmem_limit_bytes=vmem_limit),
        )(x2, wb)
        return out.reshape(B, C, H, W)

    # -------------------- two-pass large-S fallback --------------------
    r_tile = 8
    sc_max = max(128, (ws_cap_bytes // (r_tile * 4 * x_isz)) // 128 * 128)
    s_chunk = min(sc_max, _round_up(S, 128))
    grid = (pl.cdiv(R, r_tile), pl.cdiv(S, s_chunk))

    # Pass A: per-row sum of squares (reduction over spatial chunks).
    ss = pl.pallas_call(
        functools.partial(_ss_kernel, s_true=S, s_chunk=s_chunk),
        out_shape=jax.ShapeDtypeStruct((R, 1), jnp.float32),
        grid_spec=pltpu.PrefetchScalarGridSpec(
            num_scalar_prefetch=0,
            grid=grid,
            in_specs=[pl.BlockSpec((r_tile, s_chunk), lambda i, s: (i, s))],
            out_specs=pl.BlockSpec((r_tile, 1), lambda i, s: (i, 0)),
        ),
        compiler_params=pltpu.CompilerParams(
            dimension_semantics=("parallel", "arbitrary"),
            vmem_limit_bytes=vmem_limit),
    )(x2)

    # Tiny (R, 1)/(R, 2) math between the passes stays in XLA.
    inv = jax.lax.rsqrt(ss * (1.0 / float(S)) + float(eps))    # (R, 1) f32
    sb = jnp.concatenate(
        [inv * w_rows[:, None].astype(jnp.float32),
         b_rows[:, None].astype(jnp.float32)], axis=-1)        # (R, 2) f32

    # Pass B: normalize + scale/shift.
    out = pl.pallas_call(
        _apply_kernel,
        out_shape=jax.ShapeDtypeStruct((R, S), x.dtype),
        grid_spec=pltpu.PrefetchScalarGridSpec(
            num_scalar_prefetch=0,
            grid=grid,
            in_specs=[
                pl.BlockSpec((r_tile, s_chunk), lambda i, s: (i, s)),
                pl.BlockSpec((r_tile, 2), lambda i, s: (i, 0)),
            ],
            out_specs=pl.BlockSpec((r_tile, s_chunk), lambda i, s: (i, s)),
        ),
        compiler_params=pltpu.CompilerParams(
            dimension_semantics=("parallel", "parallel"),
            vmem_limit_bytes=vmem_limit),
    )(x2, sb)
    return out.reshape(B, C, H, W)


def spatial_rmsnorm_ref(x, scale, bias, eps=1e-5):
    B, C, H, W = x.shape
    xf = x.reshape(B, C, -1).astype(jnp.float32)
    inv = jax.lax.rsqrt(jnp.mean(xf * xf, axis=-1, keepdims=True) + eps)
    y = xf * inv * scale.reshape(-1, 1).astype(jnp.float32) \
        + bias.reshape(-1, 1).astype(jnp.float32)
    return y.reshape(B, C, H, W).astype(x.dtype)


if __name__ == "__main__":
    key = jax.random.PRNGKey(0)
    B, C, H, W = 2, 4, 16, 16

    x = jax.random.normal(key, (B, C, H, W), dtype=jnp.float32)
    # Parameter init matching nn.Parameter(torch.ones/zeros, bf16).
    scale = jnp.ones((C,), dtype=jnp.bfloat16)
    bias = jnp.zeros((C,), dtype=jnp.bfloat16)

    y = spatial_rmsnorm(x, scale, bias, eps=1e-5)
    jax.block_until_ready(y)
    y_ref = spatial_rmsnorm_ref(x, scale, bias, eps=1e-5)
    assert y.shape == (B, C, H, W) and y.dtype == x.dtype
    assert jnp.allclose(y, y_ref, atol=1e-5, rtol=1e-5)

    # Non-128-multiple S (H*W=120), odd channel count, R not a multiple of the
    # row tile -> exercises masked tail stores + dropped edge-block rows.
    x2 = jax.random.normal(jax.random.PRNGKey(1), (3, 5, 12, 10), dtype=jnp.float32)
    s2 = (jnp.arange(5, dtype=jnp.float32) * 0.1 + 0.5).astype(jnp.bfloat16)
    b2 = (jnp.arange(5, dtype=jnp.float32) * 0.01 - 0.02).astype(jnp.bfloat16)
    y2 = spatial_rmsnorm(x2, s2, b2, eps=1e-5)
    jax.block_until_ready(y2)
    assert jnp.allclose(y2, spatial_rmsnorm_ref(x2, s2, b2, eps=1e-5),
                        atol=1e-4, rtol=1e-4)

    # Force the large-S two-pass path (spatial chunking + in-kernel tail mask)
    # at small shapes by shrinking the working-set budget.
    x3 = jax.random.normal(jax.random.PRNGKey(2), (2, 3, 31, 47), dtype=jnp.float32)
    s3 = (jnp.arange(3, dtype=jnp.float32) * 0.2 + 0.8).astype(jnp.bfloat16)
    b3 = (jnp.arange(3, dtype=jnp.float32) * 0.05 - 0.1).astype(jnp.bfloat16)
    y3 = spatial_rmsnorm(x3, s3, b3, eps=1e-5, ws_cap_bytes=64 * 1024)
    jax.block_until_ready(y3)
    assert jnp.allclose(y3, spatial_rmsnorm_ref(x3, s3, b3, eps=1e-5),
                        atol=1e-4, rtol=1e-4)

    print("KERNEL_OK")
</pallas_src>

<mosaic_0001>
module attributes {stable_mosaic.version = 11 : i64} {
  func.func @_rmsnorm_fused_kernel(%arg0: i32, %arg1: memref<8x256xf32, #tpu.memory_space<vmem>>, %arg2: memref<8x2xbf16, #tpu.memory_space<vmem>>, %arg3: memref<8x256xf32, #tpu.memory_space<vmem>>) attributes {dimension_semantics = [#tpu.dimension_semantics<parallel>], iteration_bounds = array<i64: 1>, scalar_prefetch = 0 : i64, scratch_operands = 0 : i64, tpu.core_type = #tpu.core_type<tc>, window_params = [{transform_indices = @transform_0, window_bounds = array<i64: 8, 256>}, {transform_indices = @transform_1, window_bounds = array<i64: 8, 2>}, {transform_indices = @transform_2, window_bounds = array<i64: 8, 256>}]} {
    %c0 = arith.constant 0 : index
    %c0_0 = arith.constant 0 : index
    %0 = vector.load %arg1[%c0, %c0_0] : memref<8x256xf32, #tpu.memory_space<vmem>>, vector<8x256xf32>
    %1 = arith.mulf %0, %0 : vector<8x256xf32>
    %cst = arith.constant dense<0.000000e+00> : vector<8xf32>
    %2 = vector.multi_reduction <add>, %1, %cst [1] : vector<8x256xf32> to vector<8xf32>
    %3 = vector.shape_cast %2 : vector<8xf32> to vector<8x1xf32>
    %cst_1 = arith.constant 3.906250e-03 : f32
    %4 = vector.broadcast %cst_1 : f32 to vector<8x1xf32>
    %5 = arith.mulf %3, %4 : vector<8x1xf32>
    %cst_2 = arith.constant 9.99999974E-6 : f32
    %6 = vector.broadcast %cst_2 : f32 to vector<8x1xf32>
    %7 = arith.addf %5, %6 : vector<8x1xf32>
    %8 = math.rsqrt %7 : vector<8x1xf32>
    %c0_3 = arith.constant 0 : index
    %c0_4 = arith.constant 0 : index
    %9 = vector.load %arg2[%c0_3, %c0_4] : memref<8x2xbf16, #tpu.memory_space<vmem>>, vector<8x1xbf16>
    %10 = arith.extf %9 : vector<8x1xbf16> to vector<8x1xf32>
    %c0_5 = arith.constant 0 : index
    %c1 = arith.constant 1 : index
    %11 = vector.load %arg2[%c0_5, %c1] : memref<8x2xbf16, #tpu.memory_space<vmem>>, vector<8x1xbf16>
    %12 = arith.extf %11 : vector<8x1xbf16> to vector<8x1xf32>
    %13 = arith.mulf %8, %10 : vector<8x1xf32>
    %c0_6 = arith.constant 0 : index
    %c0_7 = arith.constant 0 : index
    %14 = vector.load %arg1[%c0_6, %c0_7] : memref<8x256xf32, #tpu.memory_space<vmem>>, vector<8x256xf32>
    %15 = vector.broadcast %13 : vector<8x1xf32> to vector<8x256xf32>
    %16 = arith.mulf %14, %15 : vector<8x256xf32>
    %17 = vector.broadcast %12 : vector<8x1xf32> to vector<8x256xf32>
    %18 = arith.addf %16, %17 : vector<8x256xf32>
    %c0_8 = arith.constant 0 : index
    %c0_9 = arith.constant 0 : index
    %19 = vector.load %arg3[%c0_8, %c0_9] : memref<8x256xf32, #tpu.memory_space<vmem>>, vector<8x256xf32>
    tpu.vector_store %arg3[%c0_8, %c0_9], %18 {strides = array<i32>} : memref<8x256xf32, #tpu.memory_space<vmem>>, vector<8x256xf32>,
    return
  }
  func.func @transform_0(%arg0: i32) -> (i32, i32) {
    %c0_i32 = arith.constant 0 : i32
    %c0_i32_0 = arith.constant 0 : i32
    return %arg0, %c0_i32 : i32, i32
  }
  func.func @transform_1(%arg0: i32) -> (i32, i32) {
    %c0_i32 = arith.constant 0 : i32
    %c0_i32_0 = arith.constant 0 : i32
    return %arg0, %c0_i32 : i32, i32
  }
  func.func @transform_2(%arg0: i32) -> (i32, i32) {
    %c0_i32 = arith.constant 0 : i32
    %c0_i32_0 = arith.constant 0 : i32
    return %arg0, %c0_i32 : i32, i32
  }
}

</mosaic_0001>

<llo_original>
// kernel: tpu_custom_call.1
$region0: #{tpu_custom_call.1}
  #allocation0 [shape = 'u32[]', space=smem, size = 0x4, offset = 0x4, fixed_abs, tag = 'smem constant byte address 0x4 - core index']
  #allocation1 [shape = 'u32[144,128]{1,0:T(1,128)}', space=vmem, size = 0x12000, scoped, tag = 'internal scratch']
  %s0 = inlined_call_operand.hbm [shape: f32[8,256], index: 0, kind: input, shape index: {}]
  %s1 = inlined_call_operand.vmem [shape: bf16[8,2], index: 1, kind: input, shape index: {}]
  %s2 = inlined_call_operand.hbm [shape: f32[8,256], index: 2, kind: output, shape index: {}]
  %s3 = sld [smem:[#allocation0]]
  $region22: #{tpu_custom_call.1} parent=0
    _
  %s5 = ssub.s32 1, %s3
  %s6 = scalar_select 0, %s5, %s3
  $region1: #{tpu_custom_call.1} parent=0
    #allocation2 [shape = 'u8[8192]{0}', space=vmem, size = 0x2000, scoped, tag = 'input window, operand 0, single buffered']
    #allocation3 [shape = 's32[1]{0}', space=sflag, size = 0x4, scoped, tag = 'scoped memory for tpu_custom_call.1']
    #allocation4 [shape = 's32[1]{0}', space=sflag, size = 0x4, scoped, tag = 'scoped memory for tpu_custom_call.1']
    #allocation5 [shape = 'u8[8192]{0}', space=vmem, size = 0x2000, scoped, tag = 'output window, operand 0, single buffered']
    %7 = vsyncpa [#allocation3], 0
    %8 = vsyncpa [#allocation4], 0
    // Predicated region
    $region2: #{tpu_custom_call.1} parent=1 // pred_check
      _
    $region3: #{tpu_custom_call.1} parent=1 // pred_check_branch
      %10 = sbr.rel (0) target = $region5
    $region4: #{tpu_custom_call.1} parent=1 // pred_region
      %s12 = ssub.s32 256, 256
      %13 = vsyncadd [#allocation3], %s12
      %s15 = sshll.u32 [#allocation2], 4
      %s16 = int_to_ptr.vmem [resolvable:$true] %s15
      %18 = dma.hbm_to_vmem [thread:$0]  %s0, 256, %s16, [#allocation3]
    $region5: #{tpu_custom_call.1} parent=1 // pred_fallthru
      _
    // Predicated region
    $region6: #{tpu_custom_call.1} parent=1 // pred_check
      _
    $region7: #{tpu_custom_call.1} parent=1 // pred_check_branch
      %20 = sbr.rel (0) target = $region9
    $region8: #{tpu_custom_call.1} parent=1 // pred_region
      _
    $region9: #{tpu_custom_call.1} parent=1 // pred_fallthru
      _
    // Predicated region
    $region10: #{tpu_custom_call.1} parent=1 // pred_check
      _
    $region11: #{tpu_custom_call.1} parent=1 // pred_check_branch
      %22 = sbr.rel (0) target = $region13
    $region12: #{tpu_custom_call.1} parent=1 // pred_region
      %23 = dma.done [#allocation3], 256
    $region13: #{tpu_custom_call.1} parent=1 // pred_fallthru
      _
    %v24 = vld [vmem:[#allocation2] sm:$0xff]
    %v25 = vld [vmem:[#allocation2 + $0x8] sm:$0xff]
    %v26 = vmul.f32 %v24, %v24
    %v27 = vmul.f32 %v25, %v25
    %v28 = vadd.f32 %v26, %v27
    %29 = vadd.xlane.f32.xlu0 %v28
    %v30 = vpop.xlane.xlu0 %29
    %v31 = vmul.f32 %v30, 0.00390625
    %v32 = vadd.f32 %v31, 1e-05
    %v33 = vrsqrt.pop %v32
    %v34 = vld [vmem:[%s1] sm:$0xf]
    %v35 = vunpack.c.l.bf16 %v34
    %v36 = vmul.f32 %v33, %v35
    %38 = vset.pattern.permute.xlu0 0
    %39 = vperm.xlu0 %38, %v36
    %v40 = vpop.permute.xlu0 %39
    %v42 = vmul.f32 %v24, %v40
    %v43 = vmul.f32 %v25, %v40
    %45 = vset.pattern.permute.xlu0 1
    %46 = vperm.xlu0 %45, %v35
    %v47 = vpop.permute.xlu0 %46
    %v49 = vadd.f32 %v42, %v47
    %v50 = vadd.f32 %v43, %v47
    %51 = vst [vmem:[#allocation5] sm:$0xff] %v49
    %52 = vst [vmem:[#allocation5 + $0x8] sm:$0xff] %v50
    // Predicated region
    $region14: #{tpu_custom_call.1} parent=1 // pred_check
      _
    $region15: #{tpu_custom_call.1} parent=1 // pred_check_branch
      %54 = sbr.rel (0) target = $region17
    $region16: #{tpu_custom_call.1} parent=1 // pred_region
      %s56 = ssub.s32 256, 256
      %57 = vsyncadd [#allocation4], %s56
      %s59 = sshll.u32 [#allocation5], 4
      %s60 = int_to_ptr.vmem [resolvable:$true] %s59
      %62 = dma.vmem_to_hbm [thread:$0]  %s60, 256, %s2, [#allocation4]
    $region17: #{tpu_custom_call.1} parent=1 // pred_fallthru
      _
    // Predicated region
    $region18: #{tpu_custom_call.1} parent=1 // pred_check
      _
    $region19: #{tpu_custom_call.1} parent=1 // pred_check_branch
      %64 = sbr.rel (0) target = $region21
    $region20: #{tpu_custom_call.1} parent=1 // pred_region
      %65 = dma.done [#allocation4], 256
    $region21: #{tpu_custom_call.1} parent=1 // pred_fallthru
      _
    %66 = vsyncpa [#allocation3], 1
    %67 = vsyncpa [#allocation4], 1

</llo_original>
